<compile_context>
chip_gen: v6e
topology: v6e:2x2x1
jax: 0.10.0
libtpu: 0.0.40
codegen_flags: <defaults>
</compile_context>

<pallas_src>
import functools

import jax
import jax.numpy as jnp
from jax.experimental import pallas as pl
from jax.experimental.pallas import tpu as pltpu


def _rp_cnn_kernel(x_ref, w_ref, b_ref, mask_ref, fcw_ref, fcb_ref, o_ref, *,
                   l_pad, c_pad):
    """Fused convs + ReLU + masked max-pool + FC + log_softmax for a batch tile.

    x_ref:    (bb, Lp, 4*D)  bf16   wrapper-built im2col tile (lane-dense)
    w_ref:    (4*D, CP)      bf16   fused conv weight (tap-stacked, channel-grouped)
    b_ref:    (1, CP)        f32    fused conv bias (zero on padded channels)
    mask_ref: (Lp, CP)       f32    0/1 per-conv valid-length mask
    fcw_ref:  (CP, RP)       bf16   FC weight (zero rows/cols on padding)
    fcb_ref:  (1, RP)        f32    FC bias (-1e30 on padded label columns)
    o_ref:    (bb, RP)       f32    log-probabilities (lane-dense store)
    """
    bb = x_ref.shape[0]
    k = x_ref.shape[2]

    # One big MXU matmul over all batch rows and time positions.
    x2d = x_ref[...].reshape(bb * l_pad, k)                       # (bb*Lp, 4D)
    acc = jnp.dot(x2d, w_ref[...],
                  preferred_element_type=jnp.float32)             # (bb*Lp, CP)
    acc = acc.reshape(bb, l_pad, c_pad)

    # Bias + ReLU, then zero out positions beyond each conv's valid length
    # (and padded channels).  ReLU output >= 0 so a 0/1 multiply is exact.
    acc = jnp.maximum(acc + b_ref[...], 0.0) * mask_ref[...]      # (bb, Lp, CP)

    feat = jnp.max(acc, axis=1)                                   # (bb, CP)

    # dropout is identity in eval mode.
    logits = jnp.dot(feat.astype(jnp.bfloat16), fcw_ref[...],
                     preferred_element_type=jnp.float32) + fcb_ref[...]

    # log_softmax along dim 1 (padded columns hold -1e30 -> exp underflows to 0).
    m = jnp.max(logits, axis=1, keepdims=True)
    z = logits - m
    lse = jnp.log(jnp.sum(jnp.exp(z), axis=1, keepdims=True))
    o_ref[...] = (z - lse).astype(o_ref.dtype)


def prepare_cnn_params(params):
    """One-time weight preparation (fusion / lane-padding / bf16 casts)."""
    D = params['embed'].shape[1]
    C = params['conv1_w'].shape[-1]
    R = params['fc_w'].shape[-1]
    CP = max(128, -(-3 * C // 128) * 128)     # conv channel lanes, padded
    RP = max(128, -(-R // 128) * 128)         # label lanes, padded

    # Fused conv weight: (4, D, CP) -> (4D, CP).  Conv K uses tap slots
    # (4-K)..3 and its own channel group; unused slots / padded channels = 0.
    w_f = jnp.zeros((4, D, CP), jnp.float32)
    w_f = w_f.at[2:4, :, 0:C].set(params['conv1_w'])          # K=2 -> slots 2,3
    w_f = w_f.at[1:4, :, C:2 * C].set(params['conv2_w'])      # K=3 -> slots 1..3
    w_f = w_f.at[0:4, :, 2 * C:3 * C].set(params['conv3_w'])  # K=4 -> slots 0..3
    w_fused = w_f.reshape(4 * D, CP).astype(jnp.bfloat16)

    b_fused = jnp.zeros((1, CP), jnp.float32)
    b_fused = b_fused.at[0, 0:3 * C].set(
        jnp.concatenate([params['conv1_b'], params['conv2_b'],
                         params['conv3_b']]))

    # FC: pad rows (conv channels) with zeros, pad columns (labels) with zero
    # weights and -1e30 bias so log_softmax over real labels is unchanged.
    fc_w = jnp.zeros((CP, RP), jnp.float32)
    fc_w = fc_w.at[:3 * C, :R].set(params['fc_w']).astype(jnp.bfloat16)
    fc_b = jnp.full((1, RP), -1e30, jnp.float32)
    fc_b = fc_b.at[0, :R].set(params['fc_b'])

    return dict(embed=params['embed'], w_fused=w_fused, b_fused=b_fused,
                fc_w=fc_w, fc_b=fc_b, D=D, C=C, R=R, CP=CP, RP=RP)


def relation_prediction_cnn(text, prepared, *, block_b=128):
    """text: (seq_len, batch) int32 token ids (PyTorch (seq, batch) convention)."""
    D, C, R = prepared['D'], prepared['C'], prepared['R']
    CP, RP = prepared['CP'], prepared['RP']
    max_pad = 3                                   # largest conv padding (K=4)

    # Glue kept in plain JAX: embedding gather + layout + lane-dense im2col.
    # TODO(synk): fold the embedding gather into the kernel via scalar
    # prefetch / pl.Element row-gather instead of XLA gather+transpose.
    emb = prepared['embed'][text]                 # (T, B, D) f32
    x = jnp.transpose(emb, (1, 0, 2))             # (B, T, D)
    B, T, _ = x.shape
    assert T >= 1, "seq_len must be >= 1 (each conv needs a valid position)"
    L = T + 3                                     # longest conv output (K=4)
    Lp = -(-L // 16) * 16                         # bf16 sublane-friendly pad

    # Batch tiling (single block for small B; parallel axis for large B).
    bb = min(block_b, B)
    n_blocks = -(-B // bb)
    B_pad = n_blocks * bb

    # Wrapper-side im2col: 4 consecutive time steps stacked on the lane axis
    # -> (B_pad, Lp, 4*D) bf16, full-lane contiguous loads in the kernel.
    x_pad = jnp.pad(x, ((0, B_pad - B), (max_pad, Lp - T), (0, 0)))
    xcol = jnp.concatenate([x_pad[:, k:k + Lp, :] for k in range(4)], axis=-1)
    xcol = xcol.astype(jnp.bfloat16)              # (B_pad, Lp, 4D)

    # Precomputed valid-length mask: conv K=2 -> T+1, K=3 -> T+2, K=4 -> T+3;
    # padded time rows and padded channels get 0.
    t_idx = jnp.arange(Lp)[:, None]
    c_idx = jnp.arange(CP)[None, :]
    limit = jnp.where(c_idx < C, T + 1,
                      jnp.where(c_idx < 2 * C, T + 2,
                                jnp.where(c_idx < 3 * C, T + 3, 0)))
    mask = (t_idx < limit).astype(jnp.float32)    # (Lp, CP)

    kernel = functools.partial(_rp_cnn_kernel, l_pad=Lp, c_pad=CP)

    out = pl.pallas_call(
        kernel,
        out_shape=jax.ShapeDtypeStruct((B_pad, RP), jnp.float32),
        grid=(n_blocks,),
        in_specs=[
            pl.BlockSpec((bb, Lp, 4 * D), lambda i: (i, 0, 0)),
            pl.BlockSpec((4 * D, CP), lambda i: (0, 0)),
            pl.BlockSpec((1, CP), lambda i: (0, 0)),
            pl.BlockSpec((Lp, CP), lambda i: (0, 0)),
            pl.BlockSpec((CP, RP), lambda i: (0, 0)),
            pl.BlockSpec((1, RP), lambda i: (0, 0)),
        ],
        out_specs=pl.BlockSpec((bb, RP), lambda i: (i, 0)),
        compiler_params=pltpu.CompilerParams(
            dimension_semantics=("parallel",)),
    )(xcol, prepared['w_fused'], prepared['b_fused'], mask,
      prepared['fc_w'], prepared['fc_b'])

    return out[:B, :R]


def reference_cnn(text, params):
    """Pure-JAX f32 reference of the PyTorch CNN forward (eval mode)."""
    emb = params['embed'][text]
    x = jnp.transpose(emb, (1, 0, 2))            # (B, T, D)
    B, T, D = x.shape
    outs = []
    for name, K in (('conv1', 2), ('conv2', 3), ('conv3', 4)):
        w = params[name + '_w']                  # (K, D, C)
        b = params[name + '_b']                  # (C,)
        p = K - 1
        xp = jnp.pad(x, ((0, 0), (p, p), (0, 0)))
        L = T + K - 1
        acc = jnp.zeros((B, L, w.shape[-1]), jnp.float32)
        for k in range(K):
            acc = acc + jnp.einsum('btd,dc->btc', xp[:, k:k + L, :], w[k])
        acc = jax.nn.relu(acc + b)
        outs.append(jnp.max(acc, axis=1))
    feat = jnp.concatenate(outs, axis=1)
    logits = feat @ params['fc_w'] + params['fc_b']
    return jax.nn.log_softmax(logits, axis=1)


def make_params(key, *, words_num, words_dim, output_channel, rel_label):
    ks = jax.random.split(key, 9)
    D, C, R = words_dim, output_channel, rel_label
    return {
        'embed': jax.random.normal(ks[0], (words_num, D), jnp.float32) * 0.1,
        # conv weights stored as (K, D, C) == PyTorch (C, 1, K, D) transposed
        'conv1_w': jax.random.normal(ks[1], (2, D, C), jnp.float32) * 0.1,
        'conv1_b': jax.random.normal(ks[2], (C,), jnp.float32) * 0.1,
        'conv2_w': jax.random.normal(ks[3], (3, D, C), jnp.float32) * 0.1,
        'conv2_b': jax.random.normal(ks[4], (C,), jnp.float32) * 0.1,
        'conv3_w': jax.random.normal(ks[5], (4, D, C), jnp.float32) * 0.1,
        'conv3_b': jax.random.normal(ks[6], (C,), jnp.float32) * 0.1,
        # fc weight stored as (3C, R) == PyTorch (R, 3C) transposed
        'fc_w': jax.random.normal(ks[7], (3 * C, R), jnp.float32) * 0.1,
        'fc_b': jax.random.normal(ks[8], (R,), jnp.float32) * 0.1,
    }


if __name__ == "__main__":
    # TODO(synk): GRU/LSTM relation_prediction_mode branches (recurrent cells)
    # are not ported; only the CNN branch is implemented here.
    SEQ, BATCH = 8, 16
    WORDS_NUM, WORDS_DIM = 100, 32
    OUTPUT_CHANNEL, REL_LABEL = 8, 16

    key = jax.random.PRNGKey(0)
    pkey, tkey = jax.random.split(key)
    params = make_params(pkey, words_num=WORDS_NUM, words_dim=WORDS_DIM,
                         output_channel=OUTPUT_CHANNEL, rel_label=REL_LABEL)

    # One-time weight fusion / padding / bf16 cast (hoisted out of the call path).
    prepared = prepare_cnn_params(params)
    prepared = jax.tree_util.tree_map(
        lambda v: jax.block_until_ready(v) if isinstance(v, jnp.ndarray) else v,
        prepared)

    # text: (seq_len, batch) int token ids, PyTorch convention.
    text = jax.random.randint(tkey, (SEQ, BATCH), 0, WORDS_NUM, dtype=jnp.int32)

    scores = jax.block_until_ready(relation_prediction_cnn(text, prepared))
    ref = jax.block_until_ready(reference_cnn(text, params))

    assert scores.shape == (BATCH, REL_LABEL)
    assert jnp.max(jnp.abs(scores - ref)) < 2e-2  # bf16 matmul tolerance

    print("KERNEL_OK")
</pallas_src>

<mosaic_0001>
module attributes {stable_mosaic.version = 11 : i64} {
  func.func @_rp_cnn_kernel(%arg0: i32, %arg1: memref<16x16x128xbf16, #tpu.memory_space<vmem>>, %arg2: memref<128x128xbf16, #tpu.memory_space<vmem>>, %arg3: memref<1x128xf32, #tpu.memory_space<vmem>>, %arg4: memref<16x128xf32, #tpu.memory_space<vmem>>, %arg5: memref<128x128xbf16, #tpu.memory_space<vmem>>, %arg6: memref<1x128xf32, #tpu.memory_space<vmem>>, %arg7: memref<16x128xf32, #tpu.memory_space<vmem>>) attributes {dimension_semantics = [#tpu.dimension_semantics<parallel>], iteration_bounds = array<i64: 1>, scalar_prefetch = 0 : i64, scratch_operands = 0 : i64, tpu.core_type = #tpu.core_type<tc>, window_params = [{transform_indices = @transform_0, window_bounds = array<i64: 16, 16, 128>}, {pipeline_mode = #tpu.pipeline_mode<synchronous>, transform_indices = @transform_1, window_bounds = array<i64: 128, 128>}, {pipeline_mode = #tpu.pipeline_mode<synchronous>, transform_indices = @transform_2, window_bounds = array<i64: 1, 128>}, {pipeline_mode = #tpu.pipeline_mode<synchronous>, transform_indices = @transform_3, window_bounds = array<i64: 16, 128>}, {pipeline_mode = #tpu.pipeline_mode<synchronous>, transform_indices = @transform_4, window_bounds = array<i64: 128, 128>}, {pipeline_mode = #tpu.pipeline_mode<synchronous>, transform_indices = @transform_5, window_bounds = array<i64: 1, 128>}, {transform_indices = @transform_6, window_bounds = array<i64: 16, 128>}]} {
    %c0 = arith.constant 0 : index
    %c0_0 = arith.constant 0 : index
    %c0_1 = arith.constant 0 : index
    %0 = vector.load %arg1[%c0, %c0_0, %c0_1] : memref<16x16x128xbf16, #tpu.memory_space<vmem>>, vector<16x16x128xbf16>
    %1 = vector.shape_cast %0 : vector<16x16x128xbf16> to vector<256x128xbf16>
    %c0_2 = arith.constant 0 : index
    %c0_3 = arith.constant 0 : index
    %2 = vector.load %arg2[%c0_2, %c0_3] : memref<128x128xbf16, #tpu.memory_space<vmem>>, vector<128x128xbf16>
    %cst = arith.constant dense<0.000000e+00> : vector<256x128xf32>
    %3 = tpu.matmul %1, %2, %cst {dimension_numbers = #tpu.dot_dimension_numbers<[1], [0], [0], [1], [0, 0, 1, 1], [], []>} : vector<256x128xbf16>, vector<128x128xbf16>, vector<256x128xf32> -> vector<256x128xf32>
    %4 = vector.shape_cast %3 : vector<256x128xf32> to vector<16x16x128xf32>
    %c0_4 = arith.constant 0 : index
    %c0_5 = arith.constant 0 : index
    %5 = vector.load %arg3[%c0_4, %c0_5] : memref<1x128xf32, #tpu.memory_space<vmem>>, vector<1x128xf32>
    %6 = vector.shape_cast %5 : vector<1x128xf32> to vector<1x1x128xf32>
    %7 = vector.broadcast %6 : vector<1x1x128xf32> to vector<16x16x128xf32>
    %8 = arith.addf %4, %7 : vector<16x16x128xf32>
    %cst_6 = arith.constant 0.000000e+00 : f32
    %9 = vector.broadcast %cst_6 : f32 to vector<16x16x128xf32>
    %10 = arith.maximumf %8, %9 : vector<16x16x128xf32>
    %c0_7 = arith.constant 0 : index
    %c0_8 = arith.constant 0 : index
    %11 = vector.load %arg4[%c0_7, %c0_8] : memref<16x128xf32, #tpu.memory_space<vmem>>, vector<16x128xf32>
    %12 = vector.shape_cast %11 : vector<16x128xf32> to vector<1x16x128xf32>
    %13 = vector.broadcast %12 : vector<1x16x128xf32> to vector<16x16x128xf32>
    %14 = arith.mulf %10, %13 : vector<16x16x128xf32>
    %cst_9 = arith.constant dense<0xFF800000> : vector<16x128xf32>
    %15 = vector.multi_reduction <maximumf>, %14, %cst_9 [1] : vector<16x16x128xf32> to vector<16x128xf32>
    %16 = arith.truncf %15 : vector<16x128xf32> to vector<16x128xbf16>
    %c0_10 = arith.constant 0 : index
    %c0_11 = arith.constant 0 : index
    %17 = vector.load %arg5[%c0_10, %c0_11] : memref<128x128xbf16, #tpu.memory_space<vmem>>, vector<128x128xbf16>
    %cst_12 = arith.constant dense<0.000000e+00> : vector<16x128xf32>
    %18 = tpu.matmul %16, %17, %cst_12 {dimension_numbers = #tpu.dot_dimension_numbers<[1], [0], [0], [1], [0, 0, 1, 1], [], []>} : vector<16x128xbf16>, vector<128x128xbf16>, vector<16x128xf32> -> vector<16x128xf32>
    %c0_13 = arith.constant 0 : index
    %c0_14 = arith.constant 0 : index
    %19 = vector.load %arg6[%c0_13, %c0_14] : memref<1x128xf32, #tpu.memory_space<vmem>>, vector<1x128xf32>
    %20 = vector.broadcast %19 : vector<1x128xf32> to vector<16x128xf32>
    %21 = arith.addf %18, %20 : vector<16x128xf32>
    %cst_15 = arith.constant dense<0xFF800000> : vector<16xf32>
    %22 = vector.multi_reduction <maximumf>, %21, %cst_15 [1] : vector<16x128xf32> to vector<16xf32>
    %23 = vector.shape_cast %22 : vector<16xf32> to vector<16x1xf32>
    %24 = vector.broadcast %23 : vector<16x1xf32> to vector<16x128xf32>
    %25 = arith.subf %21, %24 : vector<16x128xf32>
    %26 = math.exp %25 : vector<16x128xf32>
    %cst_16 = arith.constant dense<0.000000e+00> : vector<16xf32>
    %27 = vector.multi_reduction <add>, %26, %cst_16 [1] : vector<16x128xf32> to vector<16xf32>
    %28 = vector.shape_cast %27 : vector<16xf32> to vector<16x1xf32>
    %29 = math.log %28 : vector<16x1xf32>
    %30 = vector.broadcast %29 : vector<16x1xf32> to vector<16x128xf32>
    %31 = arith.subf %25, %30 : vector<16x128xf32>
    %c0_17 = arith.constant 0 : index
    %c0_18 = arith.constant 0 : index
    %32 = vector.load %arg7[%c0_17, %c0_18] : memref<16x128xf32, #tpu.memory_space<vmem>>, vector<16x128xf32>
    tpu.vector_store %arg7[%c0_17, %c0_18], %31 {strides = array<i32>} : memref<16x128xf32, #tpu.memory_space<vmem>>, vector<16x128xf32>,
    return
  }
  func.func @transform_0(%arg0: i32) -> (i32, i32, i32) {
    %c0_i32 = arith.constant 0 : i32
    %c0_i32_0 = arith.constant 0 : i32
    %c0_i32_1 = arith.constant 0 : i32
    return %arg0, %c0_i32, %c0_i32_0 : i32, i32, i32
  }
  func.func @transform_1(%arg0: i32) -> (i32, i32) {
    %c0_i32 = arith.constant 0 : i32
    %c0_i32_0 = arith.constant 0 : i32
    %c0_i32_1 = arith.constant 0 : i32
    return %c0_i32, %c0_i32_0 : i32, i32
  }
  func.func @transform_2(%arg0: i32) -> (i32, i32) {
    %c0_i32 = arith.constant 0 : i32
    %c0_i32_0 = arith.constant 0 : i32
    %c0_i32_1 = arith.constant 0 : i32
    return %c0_i32, %c0_i32_0 : i32, i32
  }
  func.func @transform_3(%arg0: i32) -> (i32, i32) {
    %c0_i32 = arith.constant 0 : i32
    %c0_i32_0 = arith.constant 0 : i32
    %c0_i32_1 = arith.constant 0 : i32
    return %c0_i32, %c0_i32_0 : i32, i32
  }
  func.func @transform_4(%arg0: i32) -> (i32, i32) {
    %c0_i32 = arith.constant 0 : i32
    %c0_i32_0 = arith.constant 0 : i32
    %c0_i32_1 = arith.constant 0 : i32
    return %c0_i32, %c0_i32_0 : i32, i32
  }
  func.func @transform_5(%arg0: i32) -> (i32, i32) {
    %c0_i32 = arith.constant 0 : i32
    %c0_i32_0 = arith.constant 0 : i32
    %c0_i32_1 = arith.constant 0 : i32
    return %c0_i32, %c0_i32_0 : i32, i32
  }
  func.func @transform_6(%arg0: i32) -> (i32, i32) {
    %c0_i32 = arith.constant 0 : i32
    %c0_i32_0 = arith.constant 0 : i32
    return %arg0, %c0_i32 : i32, i32
  }
}

</mosaic_0001>

<llo_original>
// kernel: tpu_custom_call.1
$region0: #{tpu_custom_call.1}
  #allocation0 [shape = 'u32[]', space=smem, size = 0x4, offset = 0x4, fixed_abs, tag = 'smem constant byte address 0x4 - core index']
  #allocation1 [shape = 'u32[144,128]{1,0:T(1,128)}', space=vmem, size = 0x12000, scoped, tag = 'internal scratch']
  %s0 = inlined_call_operand.hbm [shape: bf16[16,16,128], index: 0, kind: input, shape index: {}]
  %s1 = inlined_call_operand.hbm [shape: bf16[128,128], index: 1, kind: input, shape index: {}]
  %s2 = inlined_call_operand.vmem [shape: f32[1,128], index: 2, kind: input, shape index: {}]
  %s3 = inlined_call_operand.hbm [shape: f32[16,128], index: 3, kind: input, shape index: {}]
  %s4 = inlined_call_operand.hbm [shape: bf16[128,128], index: 4, kind: input, shape index: {}]
  %s5 = inlined_call_operand.vmem [shape: f32[1,128], index: 5, kind: input, shape index: {}]
  %s6 = inlined_call_operand.hbm [shape: f32[16,128], index: 6, kind: output, shape index: {}]
  %s7 = sld [smem:[#allocation0]]
  $region50: #{tpu_custom_call.1} parent=0
    _
  %s9 = ssub.s32 1, %s7
  %s10 = scalar_select 0, %s9, %s7
  $region1: #{tpu_custom_call.1} parent=0
    #allocation2 [shape = 'u8[65536]{0}', space=vmem, size = 0x10000, scoped, tag = 'input window, operand 0, single buffered']
    #allocation3 [shape = 's32[1]{0}', space=sflag, size = 0x4, scoped, tag = 'scoped memory for tpu_custom_call.1']
    #allocation4 [shape = 's32[1]{0}', space=sflag, size = 0x4, scoped, tag = 'scoped memory for tpu_custom_call.1']
    #allocation5 [shape = 'u8[32768]{0}', space=vmem, size = 0x8000, scoped, tag = 'input window, operand 1, single buffered']
    #allocation6 [shape = 's32[1]{0}', space=sflag, size = 0x4, scoped, tag = 'scoped memory for tpu_custom_call.1']
    #allocation7 [shape = 'u8[8192]{0}', space=vmem, size = 0x2000, scoped, tag = 'input window, operand 3, single buffered']
    #allocation8 [shape = 'u8[32768]{0}', space=vmem, size = 0x8000, scoped, tag = 'input window, operand 4, single buffered']
    #allocation9 [shape = 's32[1]{0}', space=sflag, size = 0x4, scoped, tag = 'scoped memory for tpu_custom_call.1']
    #allocation10 [shape = 'u8[8192]{0}', space=vmem, size = 0x2000, scoped, tag = 'output window, operand 0, single buffered']
    %11 = vsyncpa [#allocation3], 0
    %12 = vsyncpa [#allocation6], 0
    %13 = vsyncpa [#allocation9], 0
    %14 = vsyncpa [#allocation4], 0
    // Predicated region
    $region2: #{tpu_custom_call.1} parent=1 // pred_check
      _
    $region3: #{tpu_custom_call.1} parent=1 // pred_check_branch
      %16 = sbr.rel (0) target = $region5
    $region4: #{tpu_custom_call.1} parent=1 // pred_region
      %s18 = ssub.s32 2048, 2048
      %19 = vsyncadd [#allocation3], %s18
      %s20 = sshll.u32 [#allocation2], 4
      %s21 = int_to_ptr.vmem [resolvable:$true] %s20
      %26 = dma.hbm_to_vmem [thread:$0]  %s0, 2048, %s21, [#allocation3], 64, 64, 4
    $region5: #{tpu_custom_call.1} parent=1 // pred_fallthru
      _
    // Predicated region
    $region6: #{tpu_custom_call.1} parent=1 // pred_check
      _
    $region7: #{tpu_custom_call.1} parent=1 // pred_check_branch
      %28 = sbr.rel (0) target = $region9
    $region8: #{tpu_custom_call.1} parent=1 // pred_region
      %s30 = ssub.s32 1024, 1024
      %31 = vsyncadd [#allocation6], %s30
      %s32 = sshll.u32 [#allocation5], 4
      %s33 = int_to_ptr.vmem [resolvable:$true] %s32
      %38 = dma.hbm_to_vmem [thread:$0]  %s1, 1024, %s33, [#allocation6], 64, 64, 4
    $region9: #{tpu_custom_call.1} parent=1 // pred_fallthru
      _
    // Predicated region
    $region10: #{tpu_custom_call.1} parent=1 // pred_check
      _
    $region11: #{tpu_custom_call.1} parent=1 // pred_check_branch
      %40 = sbr.rel (0) target = $region13
    $region12: #{tpu_custom_call.1} parent=1 // pred_region
      _
    $region13: #{tpu_custom_call.1} parent=1 // pred_fallthru
      _
    // Predicated region
    $region14: #{tpu_custom_call.1} parent=1 // pred_check
      _
    $region15: #{tpu_custom_call.1} parent=1 // pred_check_branch
      %42 = sbr.rel (0) target = $region17
    $region16: #{tpu_custom_call.1} parent=1 // pred_region
      %s44 = ssub.s32 256, 256
      %45 = vsyncadd [#allocation6], %s44
      %s46 = sshll.u32 [#allocation7], 4
      %s47 = int_to_ptr.vmem [resolvable:$true] %s46
      %52 = dma.hbm_to_vmem [thread:$0]  %s3, 256, %s47, [#allocation6], 128, 128, 8
    $region17: #{tpu_custom_call.1} parent=1 // pred_fallthru
      _
    // Predicated region
    $region18: #{tpu_custom_call.1} parent=1 // pred_check
      _
    $region19: #{tpu_custom_call.1} parent=1 // pred_check_branch
      %54 = sbr.rel (0) target = $region21
    $region20: #{tpu_custom_call.1} parent=1 // pred_region
      %s56 = ssub.s32 1024, 1024
      %57 = vsyncadd [#allocation9], %s56
      %s58 = sshll.u32 [#allocation8], 4
      %s59 = int_to_ptr.vmem [resolvable:$true] %s58
      %64 = dma.hbm_to_vmem [thread:$0]  %s4, 1024, %s59, [#allocation9], 64, 64, 4
    $region21: #{tpu_custom_call.1} parent=1 // pred_fallthru
      _
    // Predicated region
    $region22: #{tpu_custom_call.1} parent=1 // pred_check
      _
    $region23: #{tpu_custom_call.1} parent=1 // pred_check_branch
      %66 = sbr.rel (0) target = $region25
    $region24: #{tpu_custom_call.1} parent=1 // pred_region
      _
    $region25: #{tpu_custom_call.1} parent=1 // pred_fallthru
      _
    // Predicated region
    $region26: #{tpu_custom_call.1} parent=1 // pred_check
      _
    $region27: #{tpu_custom_call.1} parent=1 // pred_check_branch
      %68 = sbr.rel (0) target = $region29
    $region28: #{tpu_custom_call.1} parent=1 // pred_region
      %69 = dma.done [#allocation3], 2048
    $region29: #{tpu_custom_call.1} parent=1 // pred_fallthru
      _
    // Predicated region
    $region30: #{tpu_custom_call.1} parent=1 // pred_check
      _
    $region31: #{tpu_custom_call.1} parent=1 // pred_check_branch
      %71 = sbr.rel (0) target = $region33
    $region32: #{tpu_custom_call.1} parent=1 // pred_region
      %72 = dma.done [#allocation6], 1024
    $region33: #{tpu_custom_call.1} parent=1 // pred_fallthru
      _
    // Predicated region
    $region34: #{tpu_custom_call.1} parent=1 // pred_check
      _
    $region35: #{tpu_custom_call.1} parent=1 // pred_check_branch
      %74 = sbr.rel (0) target = $region37
    $region36: #{tpu_custom_call.1} parent=1 // pred_region
      %75 = dma.done [#allocation6], 256
    $region37: #{tpu_custom_call.1} parent=1 // pred_fallthru
      _
    // Predicated region
    $region38: #{tpu_custom_call.1} parent=1 // pred_check
      _
    $region39: #{tpu_custom_call.1} parent=1 // pred_check_branch
      %77 = sbr.rel (0) target = $region41
    $region40: #{tpu_custom_call.1} parent=1 // pred_region
      %78 = dma.done [#allocation9], 1024
    $region41: #{tpu_custom_call.1} parent=1 // pred_fallthru
      _
    %v80 = vld [vmem:[#allocation2] sm:$0xf]
    %v81 = vld [vmem:[#allocation2 + $0x4] sm:$0xf]
    %v82 = vld [vmem:[#allocation2 + $0x8] sm:$0xf]
    %v83 = vld [vmem:[#allocation2 + $0xc] sm:$0xf]
    %v84 = vld [vmem:[#allocation2 + $0x10] sm:$0xf]
    %v85 = vld [vmem:[#allocation2 + $0x14] sm:$0xf]
    %v86 = vld [vmem:[#allocation2 + $0x18] sm:$0xf]
    %v87 = vld [vmem:[#allocation2 + $0x1c] sm:$0xf]
    %v88 = vld [vmem:[#allocation2 + $0x20] sm:$0xf]
    %v89 = vld [vmem:[#allocation2 + $0x24] sm:$0xf]
    %v90 = vld [vmem:[#allocation2 + $0x28] sm:$0xf]
    %v91 = vld [vmem:[#allocation2 + $0x2c] sm:$0xf]
    %v92 = vld [vmem:[#allocation2 + $0x30] sm:$0xf]
    %v93 = vld [vmem:[#allocation2 + $0x34] sm:$0xf]
    %v94 = vld [vmem:[#allocation2 + $0x38] sm:$0xf]
    %v95 = vld [vmem:[#allocation2 + $0x3c] sm:$0xf]
    %v96 = vld [vmem:[#allocation2 + $0x40] sm:$0xf]
    %v97 = vld [vmem:[#allocation2 + $0x44] sm:$0xf]
    %v98 = vld [vmem:[#allocation2 + $0x48] sm:$0xf]
    %v99 = vld [vmem:[#allocation2 + $0x4c] sm:$0xf]
    %v100 = vld [vmem:[#allocation2 + $0x50] sm:$0xf]
    %v101 = vld [vmem:[#allocation2 + $0x54] sm:$0xf]
    %v102 = vld [vmem:[#allocation2 + $0x58] sm:$0xf]
    %v103 = vld [vmem:[#allocation2 + $0x5c] sm:$0xf]
    %v104 = vld [vmem:[#allocation2 + $0x60] sm:$0xf]
    %v105 = vld [vmem:[#allocation2 + $0x64] sm:$0xf]
    %v106 = vld [vmem:[#allocation2 + $0x68] sm:$0xf]
    %v107 = vld [vmem:[#allocation2 + $0x6c] sm:$0xf]
    %v108 = vld [vmem:[#allocation2 + $0x70] sm:$0xf]
    %v109 = vld [vmem:[#allocation2 + $0x74] sm:$0xf]
    %v110 = vld [vmem:[#allocation2 + $0x78] sm:$0xf]
    %v111 = vld [vmem:[#allocation2 + $0x7c] sm:$0xf]
    %v112 = vld [vmem:[#allocation5] sm:$0xf]
    %v113 = vld [vmem:[#allocation5 + $0x4] sm:$0xf]
    %v114 = vld [vmem:[#allocation5 + $0x8] sm:$0xf]
    %v115 = vld [vmem:[#allocation5 + $0xc] sm:$0xf]
    %v116 = vld [vmem:[#allocation5 + $0x10] sm:$0xf]
    %v117 = vld [vmem:[#allocation5 + $0x14] sm:$0xf]
    %v118 = vld [vmem:[#allocation5 + $0x18] sm:$0xf]
    %v119 = vld [vmem:[#allocation5 + $0x1c] sm:$0xf]
    %v120 = vld [vmem:[#allocation5 + $0x20] sm:$0xf]
    %v121 = vld [vmem:[#allocation5 + $0x24] sm:$0xf]
    %v122 = vld [vmem:[#allocation5 + $0x28] sm:$0xf]
    %v123 = vld [vmem:[#allocation5 + $0x2c] sm:$0xf]
    %v124 = vld [vmem:[#allocation5 + $0x30] sm:$0xf]
    %v125 = vld [vmem:[#allocation5 + $0x34] sm:$0xf]
    %v126 = vld [vmem:[#allocation5 + $0x38] sm:$0xf]
    %v127 = vld [vmem:[#allocation5 + $0x3c] sm:$0xf]
    %v160 = vunpack.c.l.b16 %v80
    %v161 = vunpack.c.l.b16 %v81
    %v162 = vunpack.c.l.b16 %v82
    %v163 = vunpack.c.l.b16 %v83
    %v164 = vunpack.c.l.b16 %v84
    %v165 = vunpack.c.l.b16 %v85
    %v166 = vunpack.c.l.b16 %v86
    %v167 = vunpack.c.l.b16 %v87
    %v168 = vunpack.c.l.b16 %v88
    %v169 = vunpack.c.l.b16 %v89
    %v170 = vunpack.c.l.b16 %v90
    %v171 = vunpack.c.l.b16 %v91
    %v172 = vunpack.c.l.b16 %v92
    %v173 = vunpack.c.l.b16 %v93
    %v174 = vunpack.c.l.b16 %v94
    %v175 = vunpack.c.l.b16 %v95
    %v176 = vunpack.c.l.b16 %v96
    %v177 = vunpack.c.l.b16 %v97
    %v178 = vunpack.c.l.b16 %v98
    %v179 = vunpack.c.l.b16 %v99
    %v180 = vunpack.c.l.b16 %v100
    %v181 = vunpack.c.l.b16 %v101
    %v182 = vunpack.c.l.b16 %v102
    %v183 = vunpack.c.l.b16 %v103
    %v184 = vunpack.c.l.b16 %v104
    %v185 = vunpack.c.l.b16 %v105
    %v186 = vunpack.c.l.b16 %v106
    %v187 = vunpack.c.l.b16 %v107
    %v188 = vunpack.c.l.b16 %v108
    %v189 = vunpack.c.l.b16 %v109
    %v190 = vunpack.c.l.b16 %v110
    %v191 = vunpack.c.l.b16 %v111
    %v192 = vpack.c.b16 %v161, %v160
    %v193 = vpack.c.b16 %v163, %v162
    %v194 = vpack.c.b16 %v165, %v164
    %v195 = vpack.c.b16 %v167, %v166
    %v196 = vpack.c.b16 %v169, %v168
    %v197 = vpack.c.b16 %v171, %v170
    %v198 = vpack.c.b16 %v173, %v172
    %v199 = vpack.c.b16 %v175, %v174
    %v200 = vpack.c.b16 %v177, %v176
    %v201 = vpack.c.b16 %v179, %v178
    %v202 = vpack.c.b16 %v181, %v180
    %v203 = vpack.c.b16 %v183, %v182
    %v204 = vpack.c.b16 %v185, %v184
    %v205 = vpack.c.b16 %v187, %v186
    %v206 = vpack.c.b16 %v189, %v188
    %v207 = vpack.c.b16 %v191, %v190
    %v240 = vunpack.c.l.b16 %v112
    %v241 = vunpack.c.l.b16 %v113
    %v242 = vunpack.c.l.b16 %v114
    %v243 = vunpack.c.l.b16 %v115
    %v244 = vunpack.c.l.b16 %v116
    %v245 = vunpack.c.l.b16 %v117
    %v246 = vunpack.c.l.b16 %v118
    %v247 = vunpack.c.l.b16 %v119
    %v248 = vunpack.c.l.b16 %v120
    %v249 = vunpack.c.l.b16 %v121
    %v250 = vunpack.c.l.b16 %v122
    %v251 = vunpack.c.l.b16 %v123
    %v252 = vunpack.c.l.b16 %v124
    %v253 = vunpack.c.l.b16 %v125
    %v254 = vunpack.c.l.b16 %v126
    %v255 = vunpack.c.l.b16 %v127
    %v256 = vpack.c.b16 %v241, %v240
    %v257 = vpack.c.b16 %v243, %v242
    %v258 = vpack.c.b16 %v245, %v244
    %v259 = vpack.c.b16 %v247, %v246
    %v260 = vpack.c.b16 %v249, %v248
    %v261 = vpack.c.b16 %v251, %v250
    %v262 = vpack.c.b16 %v253, %v252
    %v263 = vpack.c.b16 %v255, %v254
    %272 = vmatprep.subr.bf16.mxu0 0
    %273 = vmatpush1.bf16.msra.mxu0 %v263
    %274 = vmatprep.subr.bf16.mxu0 0
    %275 = vmatpush1.bf16.msra.mxu0 %v262
    %276 = vmatprep.subr.bf16.mxu0 0
    %277 = vmatpush1.bf16.msra.mxu0 %v261
    %278 = vmatprep.subr.bf16.mxu0 0
    %279 = vmatpush1.bf16.msra.mxu0 %v260
    %280 = vmatprep.subr.bf16.mxu0 0
    %281 = vmatpush1.bf16.msra.mxu0 %v259
    %282 = vmatprep.subr.bf16.mxu0 0
    %283 = vmatpush1.bf16.msra.mxu0 %v258
    %284 = vmatprep.subr.bf16.mxu0 0
    %285 = vmatpush1.bf16.msra.mxu0 %v257
    %286 = vmatprep.subr.bf16.mxu0 0
    %287 = vmatpush1.bf16.msra.mxu0 %v256
    %288 = vmatprep.subr.bf16.mxu0 0
    %289 = vmatpush2.bf16.msra.mxu0 0
    %290 = vmatprep.subr.bf16.mxu0 0
    %291 = vmatpush2.bf16.msra.mxu0 0
    %292 = vmatprep.subr.bf16.mxu0 0
    %293 = vmatpush2.bf16.msra.mxu0 0
    %294 = vmatprep.subr.bf16.mxu0 0
    %295 = vmatpush2.bf16.msra.mxu0 0
    %296 = vmatprep.subr.bf16.mxu0 0
    %297 = vmatpush2.bf16.msra.mxu0 0
    %298 = vmatprep.subr.bf16.mxu0 0
    %299 = vmatpush2.bf16.msra.mxu0 0
    %300 = vmatprep.subr.bf16.mxu0 0
    %301 = vmatpush2.bf16.msra.mxu0 0
    %302 = vmatprep.subr.bf16.mxu0 0
    %303 = vmatpush2.bf16.msra.mxu0 0
    %304 = vmatprep.mubr.bf16.mxu0 0
    %305 = vmatmul.mubr.bf16.gmra.mxu0 %v192
    %v306 = vpop.f32.mrf.mxu0
    %v307 = vadd.f32 0.0, %v306
    %v308 = vpop.f32.mrf.mxu0
    %v309 = vpop.f32.mrf.mxu0
    %v310 = vadd.f32 0.0, %v309
    %v311 = vpop.f32.mrf.mxu0
    %312 = vmatprep.mubr.bf16.mxu0 0
    %313 = vmatmul.mubr.bf16.gmra.mxu0 %v193
    %v314 = vpop.f32.mrf.mxu0
    %v315 = vadd.f32 0.0, %v314
    %v316 = vpop.f32.mrf.mxu0
    %v317 = vpop.f32.mrf.mxu0
    %v318 = vadd.f32 0.0, %v317
    %v319 = vpop.f32.mrf.mxu0
    %320 = vmatprep.mubr.bf16.mxu0 0
    %321 = vmatmul.mubr.bf16.gmra.mxu0 %v194
    %v322 = vpop.f32.mrf.mxu0
    %v323 = vadd.f32 0.0, %v322
    %v324 = vpop.f32.mrf.mxu0
    %v325 = vpop.f32.mrf.mxu0
    %v326 = vadd.f32 0.0, %v325
    %v327 = vpop.f32.mrf.mxu0
    %328 = vmatprep.mubr.bf16.mxu0 0
    %329 = vmatmul.mubr.bf16.gmra.mxu0 %v195
    %v330 = vpop.f32.mrf.mxu0
    %v331 = vadd.f32 0.0, %v330
    %v332 = vpop.f32.mrf.mxu0
    %v333 = vpop.f32.mrf.mxu0
    %v334 = vadd.f32 0.0, %v333
    %v335 = vpop.f32.mrf.mxu0
    %336 = vmatprep.mubr.bf16.mxu0 0
    %337 = vmatmul.mubr.bf16.gmra.mxu0 %v196
    %v338 = vpop.f32.mrf.mxu0
    %v339 = vadd.f32 0.0, %v338
    %v340 = vpop.f32.mrf.mxu0
    %v341 = vpop.f32.mrf.mxu0
    %v342 = vadd.f32 0.0, %v341
    %v343 = vpop.f32.mrf.mxu0
    %344 = vmatprep.mubr.bf16.mxu0 0
    %345 = vmatmul.mubr.bf16.gmra.mxu0 %v197
    %v346 = vpop.f32.mrf.mxu0
    %v347 = vadd.f32 0.0, %v346
    %v348 = vpop.f32.mrf.mxu0
    %v349 = vpop.f32.mrf.mxu0
    %v350 = vadd.f32 0.0, %v349
    %v351 = vpop.f32.mrf.mxu0
    %352 = vmatprep.mubr.bf16.mxu0 0
    %353 = vmatmul.mubr.bf16.gmra.mxu0 %v198
    %v354 = vpop.f32.mrf.mxu0
    %v355 = vadd.f32 0.0, %v354
    %v356 = vpop.f32.mrf.mxu0
    %v357 = vpop.f32.mrf.mxu0
    %v358 = vadd.f32 0.0, %v357
    %v359 = vpop.f32.mrf.mxu0
    %360 = vmatprep.mubr.bf16.mxu0 0
    %361 = vmatmul.mubr.bf16.gmra.mxu0 %v199
    %v362 = vpop.f32.mrf.mxu0
    %v363 = vadd.f32 0.0, %v362
    %v364 = vpop.f32.mrf.mxu0
    %v365 = vpop.f32.mrf.mxu0
    %v366 = vadd.f32 0.0, %v365
    %v367 = vpop.f32.mrf.mxu0
    %368 = vmatprep.mubr.bf16.mxu0 0
    %369 = vmatmul.mubr.bf16.gmra.mxu0 %v200
    %v370 = vpop.f32.mrf.mxu0
    %v371 = vadd.f32 0.0, %v370
    %v372 = vpop.f32.mrf.mxu0
    %v373 = vpop.f32.mrf.mxu0
    %v374 = vadd.f32 0.0, %v373
    %v375 = vpop.f32.mrf.mxu0
    %376 = vmatprep.mubr.bf16.mxu0 0
    %377 = vmatmul.mubr.bf16.gmra.mxu0 %v201
    %v378 = vpop.f32.mrf.mxu0
    %v379 = vadd.f32 0.0, %v378
    %v380 = vpop.f32.mrf.mxu0
    %v381 = vpop.f32.mrf.mxu0
    %v382 = vadd.f32 0.0, %v381
    %v383 = vpop.f32.mrf.mxu0
    %384 = vmatprep.mubr.bf16.mxu0 0
    %385 = vmatmul.mubr.bf16.gmra.mxu0 %v202
    %v386 = vpop.f32.mrf.mxu0
    %v387 = vadd.f32 0.0, %v386
    %v388 = vpop.f32.mrf.mxu0
    %v389 = vpop.f32.mrf.mxu0
    %v390 = vadd.f32 0.0, %v389
    %v391 = vpop.f32.mrf.mxu0
    %392 = vmatprep.mubr.bf16.mxu0 0
    %393 = vmatmul.mubr.bf16.gmra.mxu0 %v203
    %v394 = vpop.f32.mrf.mxu0
    %v395 = vadd.f32 0.0, %v394
    %v396 = vpop.f32.mrf.mxu0
    %v397 = vpop.f32.mrf.mxu0
    %v398 = vadd.f32 0.0, %v397
    %v399 = vpop.f32.mrf.mxu0
    %400 = vmatprep.mubr.bf16.mxu0 0
    %401 = vmatmul.mubr.bf16.gmra.mxu0 %v204
    %v402 = vpop.f32.mrf.mxu0
    %v403 = vadd.f32 0.0, %v402
    %v404 = vpop.f32.mrf.mxu0
    %v405 = vpop.f32.mrf.mxu0
    %v406 = vadd.f32 0.0, %v405
    %v407 = vpop.f32.mrf.mxu0
    %408 = vmatprep.mubr.bf16.mxu0 0
    %409 = vmatmul.mubr.bf16.gmra.mxu0 %v205
    %v410 = vpop.f32.mrf.mxu0
    %v411 = vadd.f32 0.0, %v410
    %v412 = vpop.f32.mrf.mxu0
    %v413 = vpop.f32.mrf.mxu0
    %v414 = vadd.f32 0.0, %v413
    %v415 = vpop.f32.mrf.mxu0
    %416 = vmatprep.mubr.bf16.mxu0 0
    %417 = vmatmul.mubr.bf16.gmra.mxu0 %v206
    %v418 = vpop.f32.mrf.mxu0
    %v419 = vadd.f32 0.0, %v418
    %v420 = vpop.f32.mrf.mxu0
    %v421 = vpop.f32.mrf.mxu0
    %v422 = vadd.f32 0.0, %v421
    %v423 = vpop.f32.mrf.mxu0
    %424 = vmatprep.mubr.bf16.mxu0 0
    %425 = vmatmul.mubr.bf16.gmra.mxu0 %v207
    %v426 = vpop.f32.mrf.mxu0
    %v427 = vadd.f32 0.0, %v426
    %v428 = vpop.f32.mrf.mxu0
    %v429 = vpop.f32.mrf.mxu0
    %v430 = vadd.f32 0.0, %v429
    %v431 = vpop.f32.mrf.mxu0
    %432 = vdwg.mxu0
    %v433 = vld [vmem:[%s2] sm:$0x1]
    %v435 = vlaneseq
    %v436 = vshrl.u32 %v435, 7
    %v437 = vsub.s32 0, %v436
    %v438 = vrot.slane %v433, %v437
    %v440 = vadd.f32 %v307, %v438
    %v441 = vadd.f32 %v310, %v438
    %v442 = vadd.f32 %v315, %v438
    %v443 = vadd.f32 %v318, %v438
    %v444 = vadd.f32 %v323, %v438
    %v445 = vadd.f32 %v326, %v438
    %v446 = vadd.f32 %v331, %v438
    %v447 = vadd.f32 %v334, %v438
    %v448 = vadd.f32 %v339, %v438
    %v449 = vadd.f32 %v342, %v438
    %v450 = vadd.f32 %v347, %v438
    %v451 = vadd.f32 %v350, %v438
    %v452 = vadd.f32 %v355, %v438
    %v453 = vadd.f32 %v358, %v438
    %v454 = vadd.f32 %v363, %v438
    %v455 = vadd.f32 %v366, %v438
    %v456 = vadd.f32 %v371, %v438
    %v457 = vadd.f32 %v374, %v438
    %v458 = vadd.f32 %v379, %v438
    %v459 = vadd.f32 %v382, %v438
    %v460 = vadd.f32 %v387, %v438
    %v461 = vadd.f32 %v390, %v438
    %v462 = vadd.f32 %v395, %v438
    %v463 = vadd.f32 %v398, %v438
    %v464 = vadd.f32 %v403, %v438
    %v465 = vadd.f32 %v406, %v438
    %v466 = vadd.f32 %v411, %v438
    %v467 = vadd.f32 %v414, %v438
    %v468 = vadd.f32 %v419, %v438
    %v469 = vadd.f32 %v422, %v438
    %v470 = vadd.f32 %v427, %v438
    %v471 = vadd.f32 %v430, %v438
    %v472 = vmax.f32 %v440, 0.0
    %v473 = vmax.f32 %v441, 0.0
    %v474 = vmax.f32 %v442, 0.0
    %v475 = vmax.f32 %v443, 0.0
    %v476 = vmax.f32 %v444, 0.0
    %v477 = vmax.f32 %v445, 0.0
    %v478 = vmax.f32 %v446, 0.0
    %v479 = vmax.f32 %v447, 0.0
    %v480 = vmax.f32 %v448, 0.0
    %v481 = vmax.f32 %v449, 0.0
    %v482 = vmax.f32 %v450, 0.0
    %v483 = vmax.f32 %v451, 0.0
    %v484 = vmax.f32 %v452, 0.0
    %v485 = vmax.f32 %v453, 0.0
    %v486 = vmax.f32 %v454, 0.0
    %v487 = vmax.f32 %v455, 0.0
    %v488 = vmax.f32 %v456, 0.0
    %v489 = vmax.f32 %v457, 0.0
    %v490 = vmax.f32 %v458, 0.0
    %v491 = vmax.f32 %v459, 0.0
    %v492 = vmax.f32 %v460, 0.0
    %v493 = vmax.f32 %v461, 0.0
    %v494 = vmax.f32 %v462, 0.0
    %v495 = vmax.f32 %v463, 0.0
    %v496 = vmax.f32 %v464, 0.0
    %v497 = vmax.f32 %v465, 0.0
    %v498 = vmax.f32 %v466, 0.0
    %v499 = vmax.f32 %v467, 0.0
    %v500 = vmax.f32 %v468, 0.0
    %v501 = vmax.f32 %v469, 0.0
    %v502 = vmax.f32 %v470, 0.0
    %v503 = vmax.f32 %v471, 0.0
    %v504 = vld [vmem:[#allocation7] sm:$0xff]
    %v505 = vld [vmem:[#allocation7 + $0x8] sm:$0xff]
    %v506 = vmul.f32 %v472, %v504
    %v507 = vmul.f32 %v473, %v505
    %v508 = vmul.f32 %v474, %v504
    %v509 = vmul.f32 %v475, %v505
    %v510 = vmul.f32 %v476, %v504
    %v511 = vmul.f32 %v477, %v505
    %v512 = vmul.f32 %v478, %v504
    %v513 = vmul.f32 %v479, %v505
    %v514 = vmul.f32 %v480, %v504
    %v515 = vmul.f32 %v481, %v505
    %v516 = vmul.f32 %v482, %v504
    %v517 = vmul.f32 %v483, %v505
    %v518 = vmul.f32 %v484, %v504
    %v519 = vmul.f32 %v485, %v505
    %v520 = vmul.f32 %v486, %v504
    %v521 = vmul.f32 %v487, %v505
    %v522 = vmul.f32 %v488, %v504
    %v523 = vmul.f32 %v489, %v505
    %v524 = vmul.f32 %v490, %v504
    %v525 = vmul.f32 %v491, %v505
    %v526 = vmul.f32 %v492, %v504
    %v527 = vmul.f32 %v493, %v505
    %v528 = vmul.f32 %v494, %v504
    %v529 = vmul.f32 %v495, %v505
    %v530 = vmul.f32 %v496, %v504
    %v531 = vmul.f32 %v497, %v505
    %v532 = vmul.f32 %v498, %v504
    %v533 = vmul.f32 %v499, %v505
    %v534 = vmul.f32 %v500, %v504
    %v535 = vmul.f32 %v501, %v505
    %v536 = vmul.f32 %v502, %v504
    %v537 = vmul.f32 %v503, %v505
    %v538 = vmax.f32 %v506, %v507
    %v539 = vrot.slane %v538, 4
    %v540 = vmax.f32 %v538, %v539
    %v541 = vrot.slane %v540, 2
    %v542 = vmax.f32 %v540, %v541
    %v543 = vrot.slane %v542, 1
    %v544 = vmax.f32 %v542, %v543
    %v545 = vmax.f32 %v508, %v509
    %v546 = vrot.slane %v545, 4
    %v547 = vmax.f32 %v545, %v546
    %v548 = vrot.slane %v547, 2
    %v549 = vmax.f32 %v547, %v548
    %v550 = vrot.slane %v549, 1
    %v551 = vmax.f32 %v549, %v550
    %v552 = vmax.f32 %v510, %v511
    %v553 = vrot.slane %v552, 4
    %v554 = vmax.f32 %v552, %v553
    %v555 = vrot.slane %v554, 2
    %v556 = vmax.f32 %v554, %v555
    %v557 = vrot.slane %v556, 1
    %v558 = vmax.f32 %v556, %v557
    %v559 = vmax.f32 %v512, %v513
    %v560 = vrot.slane %v559, 4
    %v561 = vmax.f32 %v559, %v560
    %v562 = vrot.slane %v561, 2
    %v563 = vmax.f32 %v561, %v562
    %v564 = vrot.slane %v563, 1
    %v565 = vmax.f32 %v563, %v564
    %v566 = vmax.f32 %v514, %v515
    %v567 = vrot.slane %v566, 4
    %v568 = vmax.f32 %v566, %v567
    %v569 = vrot.slane %v568, 2
    %v570 = vmax.f32 %v568, %v569
    %v571 = vrot.slane %v570, 1
    %v572 = vmax.f32 %v570, %v571
    %v573 = vmax.f32 %v516, %v517
    %v574 = vrot.slane %v573, 4
    %v575 = vmax.f32 %v573, %v574
    %v576 = vrot.slane %v575, 2
    %v577 = vmax.f32 %v575, %v576
    %v578 = vrot.slane %v577, 1
    %v579 = vmax.f32 %v577, %v578
    %v580 = vmax.f32 %v518, %v519
    %v581 = vrot.slane %v580, 4
    %v582 = vmax.f32 %v580, %v581
    %v583 = vrot.slane %v582, 2
    %v584 = vmax.f32 %v582, %v583
    %v585 = vrot.slane %v584, 1
    %v586 = vmax.f32 %v584, %v585
    %v587 = vmax.f32 %v520, %v521
    %v588 = vrot.slane %v587, 4
    %v589 = vmax.f32 %v587, %v588
    %v590 = vrot.slane %v589, 2
    %v591 = vmax.f32 %v589, %v590
    %v592 = vrot.slane %v591, 1
    %v593 = vmax.f32 %v591, %v592
    %v594 = vmax.f32 %v522, %v523
    %v595 = vrot.slane %v594, 4
    %v596 = vmax.f32 %v594, %v595
    %v597 = vrot.slane %v596, 2
    %v598 = vmax.f32 %v596, %v597
    %v599 = vrot.slane %v598, 1
    %v600 = vmax.f32 %v598, %v599
    %v601 = vmax.f32 %v524, %v525
    %v602 = vrot.slane %v601, 4
    %v603 = vmax.f32 %v601, %v602
    %v604 = vrot.slane %v603, 2
    %v605 = vmax.f32 %v603, %v604
    %v606 = vrot.slane %v605, 1
    %v607 = vmax.f32 %v605, %v606
    %v608 = vmax.f32 %v526, %v527
    %v609 = vrot.slane %v608, 4
    %v610 = vmax.f32 %v608, %v609
    %v611 = vrot.slane %v610, 2
    %v612 = vmax.f32 %v610, %v611
    %v613 = vrot.slane %v612, 1
    %v614 = vmax.f32 %v612, %v613
    %v615 = vmax.f32 %v528, %v529
    %v616 = vrot.slane %v615, 4
    %v617 = vmax.f32 %v615, %v616
    %v618 = vrot.slane %v617, 2
    %v619 = vmax.f32 %v617, %v618
    %v620 = vrot.slane %v619, 1
    %v621 = vmax.f32 %v619, %v620
    %v622 = vmax.f32 %v530, %v531
    %v623 = vrot.slane %v622, 4
    %v624 = vmax.f32 %v622, %v623
    %v625 = vrot.slane %v624, 2
    %v626 = vmax.f32 %v624, %v625
    %v627 = vrot.slane %v626, 1
    %v628 = vmax.f32 %v626, %v627
    %v629 = vmax.f32 %v532, %v533
    %v630 = vrot.slane %v629, 4
    %v631 = vmax.f32 %v629, %v630
    %v632 = vrot.slane %v631, 2
    %v633 = vmax.f32 %v631, %v632
    %v634 = vrot.slane %v633, 1
    %v635 = vmax.f32 %v633, %v634
    %v636 = vmax.f32 %v534, %v535
    %v637 = vrot.slane %v636, 4
    %v638 = vmax.f32 %v636, %v637
    %v639 = vrot.slane %v638, 2
    %v640 = vmax.f32 %v638, %v639
    %v641 = vrot.slane %v640, 1
    %v642 = vmax.f32 %v640, %v641
    %v643 = vmax.f32 %v536, %v537
    %v644 = vrot.slane %v643, 4
    %v645 = vmax.f32 %v643, %v644
    %v646 = vrot.slane %v645, 2
    %v647 = vmax.f32 %v645, %v646
    %v648 = vrot.slane %v647, 1
    %v649 = vmax.f32 %v647, %v648
    %v650 = vpack.c.bf16 %v544, %v544
    %v651 = vpack.c.bf16 %v551, %v551
    %v652 = vpack.c.bf16 %v558, %v558
    %v653 = vpack.c.bf16 %v565, %v565
    %v654 = vpack.c.bf16 %v572, %v572
    %v655 = vpack.c.bf16 %v579, %v579
    %v656 = vpack.c.bf16 %v586, %v586
    %v657 = vpack.c.bf16 %v593, %v593
    %v658 = vpack.c.bf16 %v600, %v600
    %v659 = vpack.c.bf16 %v607, %v607
    %v660 = vpack.c.bf16 %v614, %v614
    %v661 = vpack.c.bf16 %v621, %v621
    %v662 = vpack.c.bf16 %v628, %v628
    %v663 = vpack.c.bf16 %v635, %v635
    %v664 = vpack.c.bf16 %v642, %v642
    %v665 = vpack.c.bf16 %v649, %v649
    %v666 = vld [vmem:[#allocation8] sm:$0xf]
    %v667 = vld [vmem:[#allocation8 + $0x4] sm:$0xf]
    %v668 = vld [vmem:[#allocation8 + $0x8] sm:$0xf]
    %v669 = vld [vmem:[#allocation8 + $0xc] sm:$0xf]
    %v670 = vld [vmem:[#allocation8 + $0x10] sm:$0xf]
    %v671 = vld [vmem:[#allocation8 + $0x14] sm:$0xf]
    %v672 = vld [vmem:[#allocation8 + $0x18] sm:$0xf]
    %v673 = vld [vmem:[#allocation8 + $0x1c] sm:$0xf]
    %v674 = vld [vmem:[#allocation8 + $0x20] sm:$0xf]
    %v675 = vld [vmem:[#allocation8 + $0x24] sm:$0xf]
    %v676 = vld [vmem:[#allocation8 + $0x28] sm:$0xf]
    %v677 = vld [vmem:[#allocation8 + $0x2c] sm:$0xf]
    %v678 = vld [vmem:[#allocation8 + $0x30] sm:$0xf]
    %v679 = vld [vmem:[#allocation8 + $0x34] sm:$0xf]
    %v680 = vld [vmem:[#allocation8 + $0x38] sm:$0xf]
    %v681 = vld [vmem:[#allocation8 + $0x3c] sm:$0xf]
    %v682 = vld [vmem:[%s5] sm:$0x1]
    %v684 = vlaneseq
    %v685 = vshrl.u32 %v684, 7
    %v686 = vsub.s32 0, %v685
    %v687 = vrot.slane %v682, %v686
    %v705 = vunpack.c.l.b16 %v650
    %v706 = vunpack.c.l.b16 %v651
    %v707 = vunpack.c.l.b16 %v652
    %v708 = vunpack.c.l.b16 %v653
    %v709 = vunpack.c.l.b16 %v654
    %v710 = vunpack.c.l.b16 %v655
    %v711 = vunpack.c.l.b16 %v656
    %v712 = vunpack.c.l.b16 %v657
    %v713 = vunpack.c.l.b16 %v658
    %v714 = vunpack.c.l.b16 %v659
    %v715 = vunpack.c.l.b16 %v660
    %v716 = vunpack.c.l.b16 %v661
    %v717 = vunpack.c.l.b16 %v662
    %v718 = vunpack.c.l.b16 %v663
    %v719 = vunpack.c.l.b16 %v664
    %v720 = vunpack.c.l.b16 %v665
    %vm721 = vcmask 1041409
    %v722 = vsel %vm721, %v706, %v705
    %vm723 = vcmask 1042434
    %v724 = vsel %vm723, %v707, %v722
    %vm725 = vcmask 1043459
    %v726 = vsel %vm725, %v708, %v724
    %vm727 = vcmask 1044484
    %v728 = vsel %vm727, %v709, %v726
    %vm729 = vcmask 1045509
    %v730 = vsel %vm729, %v710, %v728
    %vm731 = vcmask 1046534
    %v732 = vsel %vm731, %v711, %v730
    %vm733 = vcmask 1047559
    %v734 = vsel %vm733, %v712, %v732
    %v735 = vsel %vm721, %v714, %v713
    %v736 = vsel %vm723, %v715, %v735
    %v737 = vsel %vm725, %v716, %v736
    %v738 = vsel %vm727, %v717, %v737
    %v739 = vsel %vm729, %v718, %v738
    %v740 = vsel %vm731, %v719, %v739
    %v741 = vsel %vm733, %v720, %v740
    %v742 = vpack.c.b16 %v741, %v734
    %v760 = vunpack.c.l.b16 %v666
    %v761 = vunpack.c.l.b16 %v667
    %v762 = vunpack.c.l.b16 %v668
    %v763 = vunpack.c.l.b16 %v669
    %v764 = vunpack.c.l.b16 %v670
    %v765 = vunpack.c.l.b16 %v671
    %v766 = vunpack.c.l.b16 %v672
    %v767 = vunpack.c.l.b16 %v673
    %v768 = vunpack.c.l.b16 %v674
    %v769 = vunpack.c.l.b16 %v675
    %v770 = vunpack.c.l.b16 %v676
    %v771 = vunpack.c.l.b16 %v677
    %v772 = vunpack.c.l.b16 %v678
    %v773 = vunpack.c.l.b16 %v679
    %v774 = vunpack.c.l.b16 %v680
    %v775 = vunpack.c.l.b16 %v681
    %v776 = vpack.c.b16 %v761, %v760
    %v777 = vpack.c.b16 %v763, %v762
    %v778 = vpack.c.b16 %v765, %v764
    %v779 = vpack.c.b16 %v767, %v766
    %v780 = vpack.c.b16 %v769, %v768
    %v781 = vpack.c.b16 %v771, %v770
    %v782 = vpack.c.b16 %v773, %v772
    %v783 = vpack.c.b16 %v775, %v774
    %792 = vmatprep.subr.bf16.mxu0 0
    %793 = vmatpush1.bf16.msra.mxu0 %v783
    %794 = vmatprep.subr.bf16.mxu0 0
    %795 = vmatpush1.bf16.msra.mxu0 %v782
    %796 = vmatprep.subr.bf16.mxu0 0
    %797 = vmatpush1.bf16.msra.mxu0 %v781
    %798 = vmatprep.subr.bf16.mxu0 0
    %799 = vmatpush1.bf16.msra.mxu0 %v780
    %800 = vmatprep.subr.bf16.mxu0 0
    %801 = vmatpush1.bf16.msra.mxu0 %v779
    %802 = vmatprep.subr.bf16.mxu0 0
    %803 = vmatpush1.bf16.msra.mxu0 %v778
    %804 = vmatprep.subr.bf16.mxu0 0
    %805 = vmatpush1.bf16.msra.mxu0 %v777
    %806 = vmatprep.subr.bf16.mxu0 0
    %807 = vmatpush1.bf16.msra.mxu0 %v776
    %808 = vmatprep.subr.bf16.mxu0 0
    %809 = vmatpush2.bf16.msra.mxu0 0
    %810 = vmatprep.subr.bf16.mxu0 0
    %811 = vmatpush2.bf16.msra.mxu0 0
    %812 = vmatprep.subr.bf16.mxu0 0
    %813 = vmatpush2.bf16.msra.mxu0 0
    %814 = vmatprep.subr.bf16.mxu0 0
    %815 = vmatpush2.bf16.msra.mxu0 0
    %816 = vmatprep.subr.bf16.mxu0 0
    %817 = vmatpush2.bf16.msra.mxu0 0
    %818 = vmatprep.subr.bf16.mxu0 0
    %819 = vmatpush2.bf16.msra.mxu0 0
    %820 = vmatprep.subr.bf16.mxu0 0
    %821 = vmatpush2.bf16.msra.mxu0 0
    %822 = vmatprep.subr.bf16.mxu0 0
    %823 = vmatpush2.bf16.msra.mxu0 0
    %824 = vmatprep.mubr.bf16.mxu0 0
    %825 = vmatmul.mubr.bf16.gmra.mxu0 %v742
    %v826 = vpop.f32.mrf.mxu0
    %v827 = vadd.f32 %v687, %v826
    %v828 = vpop.f32.mrf.mxu0
    %v829 = vpop.f32.mrf.mxu0
    %v830 = vadd.f32 %v687, %v829
    %v831 = vpop.f32.mrf.mxu0
    %832 = vdwg.mxu0
    %833 = vmax.xlane.f32.xlu0 %v827
    %v834 = vpop.xlane.xlu0 %833
    %835 = vmax.xlane.f32.xlu0 %v830
    %v836 = vpop.xlane.xlu0 %835
    %v837 = vsub.f32 %v827, %v834
    %v838 = vsub.f32 %v830, %v836
    %v839 = vmul.f32 %v837, 1.442695
    %v840 = vpow.pop %v839
    %v841 = vmul.f32 %v838, 1.442695
    %v842 = vpow.pop %v841
    %843 = vadd.xlane.f32.xlu0 %v840
    %v844 = vpop.xlane.xlu0 %843
    %845 = vadd.xlane.f32.xlu0 %v842
    %v846 = vpop.xlane.xlu0 %845
    %v847 = vlog2.pop %v844
    %v848 = vmul.f32 %v847, 0.6931472
    %v849 = vlog2.pop %v846
    %v850 = vmul.f32 %v849, 0.6931472
    %v851 = vsub.f32 %v837, %v848
    %v852 = vsub.f32 %v838, %v850
    %853 = vst [vmem:[#allocation10] sm:$0xff] %v851
    %854 = vst [vmem:[#allocation10 + $0x8] sm:$0xff] %v852
    // Predicated region
    $region42: #{tpu_custom_call.1} parent=1 // pred_check
      _
    $region43: #{tpu_custom_call.1} parent=1 // pred_check_branch
      %856 = sbr.rel (0) target = $region45
    $region44: #{tpu_custom_call.1} parent=1 // pred_region
      %s858 = ssub.s32 256, 256
      %859 = vsyncadd [#allocation4], %s858
      %s860 = sshll.u32 [#allocation10], 4
      %s861 = int_to_ptr.vmem [resolvable:$true] %s860
      %866 = dma.vmem_to_hbm [thread:$0]  %s861, 256, %s6, [#allocation4], 128, 128, 8
    $region45: #{tpu_custom_call.1} parent=1 // pred_fallthru
      _
    // Predicated region
    $region46: #{tpu_custom_call.1} parent=1 // pred_check
      _
    $region47: #{tpu_custom_call.1} parent=1 // pred_check_branch
      %868 = sbr.rel (0) target = $region49
    $region48: #{tpu_custom_call.1} parent=1 // pred_region
      %869 = dma.done [#allocation4], 256
    $region49: #{tpu_custom_call.1} parent=1 // pred_fallthru
      _
    %870 = vsyncpa [#allocation3], 1
    %871 = vsyncpa [#allocation6], 1
    %872 = vsyncpa [#allocation9], 1
    %873 = vsyncpa [#allocation4], 1

</llo_original>
